<compile_context>
chip_gen: v5e
topology: v5e:2x2
jax: 0.10.0
libtpu: 0.0.40
codegen_flags: <defaults>
</compile_context>

<pallas_src>
import jax
import jax.numpy as jnp
from jax.experimental import pallas as pl
from jax.experimental.pallas import tpu as pltpu

LANES = 128   # lane width: padded hidden/output width
K_PAD = 16    # padded input-feature width (bf16 sublane tile)


def mlp_kernel(x_ref, w1_ref, wstack_ref, bstack_ref, o_ref):
    # Static slices of the packed bias stack (zero-cost ref views).
    b1 = bstack_ref[0:1, :]
    b2 = bstack_ref[1:2, :]
    b3 = bstack_ref[2:3, :]
    b4 = bstack_ref[3:4, :]

    # Layer 1: (rows,16)bf16 @ (16,128)bf16 -> f32, bias+ReLU in f32.
    h = jnp.dot(x_ref[...], w1_ref[...], preferred_element_type=jnp.float32)
    h = jnp.maximum(h + b1, 0.0)

    # Layer 2
    h = jnp.dot(h.astype(jnp.bfloat16), wstack_ref[0],
                preferred_element_type=jnp.float32)
    h = jnp.maximum(h + b2, 0.0)

    # Layer 3
    h = jnp.dot(h.astype(jnp.bfloat16), wstack_ref[1],
                preferred_element_type=jnp.float32)
    h = jnp.maximum(h + b3, 0.0)

    # Layer 4 (output lanes zero-padded to 128 -> unmasked full-lane store)
    h = jnp.dot(h.astype(jnp.bfloat16), wstack_ref[2],
                preferred_element_type=jnp.float32)
    o_ref[...] = (h + b4).astype(o_ref.dtype)


def mlp_forward(x, params, *, row_tiles=1):
    """row_tiles=1 (one grid step) for v5e/v6e; set 2 on v7x to use both TCs."""
    (w1, b1), (w2, b2), (w3, b3), (w4, b4) = params
    batch, in_dim = x.shape
    h1, h2, h3 = w1.shape[1], w2.shape[1], w3.shape[1]
    out_dim = w4.shape[1]

    # ---- pad batch to a multiple of 8 * row_tiles (minimal row padding) ----
    row_mult = 8 * row_tiles
    padded_batch = ((batch + row_mult - 1) // row_mult) * row_mult
    tile_rows = padded_batch // row_tiles

    # ---- zero-pad everything to a lane-dense, bf16-tile-aligned layout ----
    # x: (batch,10) -> (padded_batch,16)
    x_p = jnp.zeros((padded_batch, K_PAD), jnp.float32)
    x_p = x_p.at[:batch, :in_dim].set(x)

    # w1: (10,64) -> (16,128); w2/w3/w4 -> (128,128) each, stacked.
    w1p = jnp.zeros((K_PAD, LANES), jnp.float32).at[:in_dim, :h1].set(w1)
    w2p = jnp.zeros((LANES, LANES), jnp.float32).at[:h1, :h2].set(w2)
    w3p = jnp.zeros((LANES, LANES), jnp.float32).at[:h2, :h3].set(w3)
    w4p = jnp.zeros((LANES, LANES), jnp.float32).at[:h3, :out_dim].set(w4)

    # biases packed into one (4,128) f32 array (padded lanes stay exactly 0).
    bstack = jnp.zeros((4, LANES), jnp.float32)
    bstack = bstack.at[0, :h1].set(b1.reshape(-1))
    bstack = bstack.at[1, :h2].set(b2.reshape(-1))
    bstack = bstack.at[2, :h3].set(b3.reshape(-1))
    bstack = bstack.at[3, :out_dim].set(b4.reshape(-1))

    # bf16 operands for the MXU.
    x_bf = x_p.astype(jnp.bfloat16)
    w1b = w1p.astype(jnp.bfloat16)
    wstack = jnp.stack([w2p, w3p, w4p]).astype(jnp.bfloat16)

    grid = (row_tiles,)

    def resident(shape):
        # Same block every grid step -> DMA'd into VMEM once, stays resident.
        idx = (0,) * len(shape)
        return pl.BlockSpec(shape, lambda i, _idx=idx: _idx)

    # Advisory cost estimate with the *real* (unpadded) workload numbers.
    flops = 2 * batch * (in_dim * h1 + h1 * h2 + h2 * h3 + h3 * out_dim)
    bytes_accessed = (
        batch * in_dim * 4                                   # x (f32 at boundary)
        + (in_dim * h1 + h1 * h2 + h2 * h3 + h3 * out_dim) * 2   # bf16 weights
        + (h1 + h2 + h3 + out_dim) * 4                       # f32 biases
        + batch * out_dim * 4                                # output
    )

    out = pl.pallas_call(
        mlp_kernel,
        out_shape=jax.ShapeDtypeStruct((padded_batch, LANES), jnp.float32),
        grid=grid,
        in_specs=[
            pl.BlockSpec((tile_rows, K_PAD), lambda i: (i, 0)),   # x: advances
            resident(w1b.shape),
            resident(wstack.shape),
            resident(bstack.shape),
        ],
        out_specs=pl.BlockSpec((tile_rows, LANES), lambda i: (i, 0)),
        compiler_params=pltpu.CompilerParams(
            dimension_semantics=("parallel",),   # shards across TCs if row_tiles=2
        ),
        cost_estimate=pl.CostEstimate(
            flops=flops, transcendentals=0, bytes_accessed=bytes_accessed),
    )(x_bf, w1b, wstack, bstack)

    # Drop batch padding and the zero-padded output lanes.
    return out[:batch, :out_dim]


def init_linear(key, in_dim, out_dim):
    """Deterministic init mimicking nn.Linear (uniform +/- 1/sqrt(in_dim)).
    Weights stored as (in, out) so the kernel computes x @ W + b, which equals
    PyTorch's x @ W_pt.T + b."""
    kw, kb = jax.random.split(key)
    bound = 1.0 / jnp.sqrt(float(in_dim))
    w = jax.random.uniform(kw, (in_dim, out_dim), jnp.float32, -bound, bound)
    b = jax.random.uniform(kb, (1, out_dim), jnp.float32, -bound, bound)
    return w, b


def reference_forward(x, params):
    """Pure-JAX reference mirroring the kernel's numerics (bf16 MXU, f32 acc)."""
    (w1, b1), (w2, b2), (w3, b3), (w4, b4) = params

    def lin(h, w, b):
        return jnp.dot(h.astype(jnp.bfloat16), w.astype(jnp.bfloat16),
                       preferred_element_type=jnp.float32) + b

    h = jnp.maximum(lin(x, w1, b1), 0.0)
    h = jnp.maximum(lin(h, w2, b2), 0.0)
    h = jnp.maximum(lin(h, w3, b3), 0.0)
    return lin(h, w4, b4)


if __name__ == "__main__":
    key = jax.random.PRNGKey(0)
    k_x, k1, k2, k3, k4 = jax.random.split(key, 5)

    batch = 442       # sklearn load_diabetes() row count (whole dataset per call)
    input_dim = 10    # 10 features
    output_dim = 1    # regression target

    x = jax.random.normal(k_x, (batch, input_dim), jnp.float32)

    params = [
        init_linear(k1, input_dim, 64),
        init_linear(k2, 64, 32),
        init_linear(k3, 32, 16),
        init_linear(k4, 16, output_dim),
    ]

    out = jax.block_until_ready(mlp_forward(x, params))

    ref = reference_forward(x, params)
    assert out.shape == (batch, output_dim)
    assert jnp.allclose(out, ref, atol=5e-3, rtol=5e-3), \
        float(jnp.max(jnp.abs(out - ref)))

    print("KERNEL_OK")
</pallas_src>

<mosaic_0001>
module attributes {stable_mosaic.version = 11 : i64} {
  func.func @mlp_kernel(%arg0: i32, %arg1: memref<448x16xbf16, #tpu.memory_space<vmem>>, %arg2: memref<16x128xbf16, #tpu.memory_space<vmem>>, %arg3: memref<3x128x128xbf16, #tpu.memory_space<vmem>>, %arg4: memref<4x128xf32, #tpu.memory_space<vmem>>, %arg5: memref<448x128xf32, #tpu.memory_space<vmem>>) attributes {dimension_semantics = [#tpu.dimension_semantics<parallel>], iteration_bounds = array<i64: 1>, scalar_prefetch = 0 : i64, scratch_operands = 0 : i64, tpu.core_type = #tpu.core_type<tc>, window_params = [{transform_indices = @transform_0, window_bounds = array<i64: 448, 16>}, {pipeline_mode = #tpu.pipeline_mode<synchronous>, transform_indices = @transform_1, window_bounds = array<i64: 16, 128>}, {pipeline_mode = #tpu.pipeline_mode<synchronous>, transform_indices = @transform_2, window_bounds = array<i64: 3, 128, 128>}, {pipeline_mode = #tpu.pipeline_mode<synchronous>, transform_indices = @transform_3, window_bounds = array<i64: 4, 128>}, {transform_indices = @transform_4, window_bounds = array<i64: 448, 128>}]} {
    %c0 = arith.constant 0 : index
    %c0_0 = arith.constant 0 : index
    %0 = vector.load %arg4[%c0, %c0_0] : memref<4x128xf32, #tpu.memory_space<vmem>>, vector<1x128xf32>
    %c1 = arith.constant 1 : index
    %c0_1 = arith.constant 0 : index
    %1 = vector.load %arg4[%c1, %c0_1] : memref<4x128xf32, #tpu.memory_space<vmem>>, vector<1x128xf32>
    %c2 = arith.constant 2 : index
    %c0_2 = arith.constant 0 : index
    %2 = vector.load %arg4[%c2, %c0_2] : memref<4x128xf32, #tpu.memory_space<vmem>>, vector<1x128xf32>
    %c3 = arith.constant 3 : index
    %c0_3 = arith.constant 0 : index
    %3 = vector.load %arg4[%c3, %c0_3] : memref<4x128xf32, #tpu.memory_space<vmem>>, vector<1x128xf32>
    %c0_4 = arith.constant 0 : index
    %c0_5 = arith.constant 0 : index
    %4 = vector.load %arg1[%c0_4, %c0_5] : memref<448x16xbf16, #tpu.memory_space<vmem>>, vector<448x16xbf16>
    %c0_6 = arith.constant 0 : index
    %c0_7 = arith.constant 0 : index
    %5 = vector.load %arg2[%c0_6, %c0_7] : memref<16x128xbf16, #tpu.memory_space<vmem>>, vector<16x128xbf16>
    %cst = arith.constant dense<0.000000e+00> : vector<448x128xf32>
    %6 = tpu.matmul %4, %5, %cst {dimension_numbers = #tpu.dot_dimension_numbers<[1], [0], [0], [1], [0, 0, 1, 1], [], []>} : vector<448x16xbf16>, vector<16x128xbf16>, vector<448x128xf32> -> vector<448x128xf32>
    %7 = vector.broadcast %0 : vector<1x128xf32> to vector<448x128xf32>
    %8 = arith.addf %6, %7 : vector<448x128xf32>
    %cst_8 = arith.constant 0.000000e+00 : f32
    %9 = vector.broadcast %cst_8 : f32 to vector<448x128xf32>
    %10 = arith.maximumf %8, %9 : vector<448x128xf32>
    %11 = arith.truncf %10 : vector<448x128xf32> to vector<448x128xbf16>
    %c0_9 = arith.constant 0 : index
    %c0_10 = arith.constant 0 : index
    %c0_11 = arith.constant 0 : index
    %12 = vector.load %arg3[%c0_9, %c0_10, %c0_11] : memref<3x128x128xbf16, #tpu.memory_space<vmem>>, vector<1x128x128xbf16>
    %13 = vector.shape_cast %12 : vector<1x128x128xbf16> to vector<128x128xbf16>
    %cst_12 = arith.constant dense<0.000000e+00> : vector<448x128xf32>
    %14 = tpu.matmul %11, %13, %cst_12 {dimension_numbers = #tpu.dot_dimension_numbers<[1], [0], [0], [1], [0, 0, 1, 1], [], []>} : vector<448x128xbf16>, vector<128x128xbf16>, vector<448x128xf32> -> vector<448x128xf32>
    %15 = vector.broadcast %1 : vector<1x128xf32> to vector<448x128xf32>
    %16 = arith.addf %14, %15 : vector<448x128xf32>
    %cst_13 = arith.constant 0.000000e+00 : f32
    %17 = vector.broadcast %cst_13 : f32 to vector<448x128xf32>
    %18 = arith.maximumf %16, %17 : vector<448x128xf32>
    %19 = arith.truncf %18 : vector<448x128xf32> to vector<448x128xbf16>
    %c1_14 = arith.constant 1 : index
    %c0_15 = arith.constant 0 : index
    %c0_16 = arith.constant 0 : index
    %20 = vector.load %arg3[%c1_14, %c0_15, %c0_16] : memref<3x128x128xbf16, #tpu.memory_space<vmem>>, vector<1x128x128xbf16>
    %21 = vector.shape_cast %20 : vector<1x128x128xbf16> to vector<128x128xbf16>
    %cst_17 = arith.constant dense<0.000000e+00> : vector<448x128xf32>
    %22 = tpu.matmul %19, %21, %cst_17 {dimension_numbers = #tpu.dot_dimension_numbers<[1], [0], [0], [1], [0, 0, 1, 1], [], []>} : vector<448x128xbf16>, vector<128x128xbf16>, vector<448x128xf32> -> vector<448x128xf32>
    %23 = vector.broadcast %2 : vector<1x128xf32> to vector<448x128xf32>
    %24 = arith.addf %22, %23 : vector<448x128xf32>
    %cst_18 = arith.constant 0.000000e+00 : f32
    %25 = vector.broadcast %cst_18 : f32 to vector<448x128xf32>
    %26 = arith.maximumf %24, %25 : vector<448x128xf32>
    %27 = arith.truncf %26 : vector<448x128xf32> to vector<448x128xbf16>
    %c2_19 = arith.constant 2 : index
    %c0_20 = arith.constant 0 : index
    %c0_21 = arith.constant 0 : index
    %28 = vector.load %arg3[%c2_19, %c0_20, %c0_21] : memref<3x128x128xbf16, #tpu.memory_space<vmem>>, vector<1x128x128xbf16>
    %29 = vector.shape_cast %28 : vector<1x128x128xbf16> to vector<128x128xbf16>
    %cst_22 = arith.constant dense<0.000000e+00> : vector<448x128xf32>
    %30 = tpu.matmul %27, %29, %cst_22 {dimension_numbers = #tpu.dot_dimension_numbers<[1], [0], [0], [1], [0, 0, 1, 1], [], []>} : vector<448x128xbf16>, vector<128x128xbf16>, vector<448x128xf32> -> vector<448x128xf32>
    %31 = vector.broadcast %3 : vector<1x128xf32> to vector<448x128xf32>
    %32 = arith.addf %30, %31 : vector<448x128xf32>
    %c0_23 = arith.constant 0 : index
    %c0_24 = arith.constant 0 : index
    %33 = vector.load %arg5[%c0_23, %c0_24] : memref<448x128xf32, #tpu.memory_space<vmem>>, vector<448x128xf32>
    tpu.vector_store %arg5[%c0_23, %c0_24], %32 {strides = array<i32>} : memref<448x128xf32, #tpu.memory_space<vmem>>, vector<448x128xf32>,
    return
  }
  func.func @transform_0(%arg0: i32) -> (i32, i32) {
    %c0_i32 = arith.constant 0 : i32
    %c0_i32_0 = arith.constant 0 : i32
    return %arg0, %c0_i32 : i32, i32
  }
  func.func @transform_1(%arg0: i32) -> (i32, i32) {
    %c0_i32 = arith.constant 0 : i32
    %c0_i32_0 = arith.constant 0 : i32
    %c0_i32_1 = arith.constant 0 : i32
    return %c0_i32, %c0_i32_0 : i32, i32
  }
  func.func @transform_2(%arg0: i32) -> (i32, i32, i32) {
    %c0_i32 = arith.constant 0 : i32
    %c0_i32_0 = arith.constant 0 : i32
    %c0_i32_1 = arith.constant 0 : i32
    %c0_i32_2 = arith.constant 0 : i32
    return %c0_i32, %c0_i32_0, %c0_i32_1 : i32, i32, i32
  }
  func.func @transform_3(%arg0: i32) -> (i32, i32) {
    %c0_i32 = arith.constant 0 : i32
    %c0_i32_0 = arith.constant 0 : i32
    %c0_i32_1 = arith.constant 0 : i32
    return %c0_i32, %c0_i32_0 : i32, i32
  }
  func.func @transform_4(%arg0: i32) -> (i32, i32) {
    %c0_i32 = arith.constant 0 : i32
    %c0_i32_0 = arith.constant 0 : i32
    return %arg0, %c0_i32 : i32, i32
  }
}

</mosaic_0001>

<llo_original>
// kernel: tpu_custom_call.1
$region0: #{tpu_custom_call.1}
  #allocation0 [shape = 'u32[]', space=smem, size = 0x4, offset = 0x4, fixed_abs, tag = 'smem constant byte address 0x4 - core index']
  #allocation1 [shape = 'u32[72,128]{1,0:T(1,128)}', space=vmem, size = 0x9000, scoped, tag = 'internal scratch']
  %s0 = inlined_call_operand.vmem [shape: bf16[448,16], index: 0, kind: input, shape index: {}]
  %s1 = inlined_call_operand.vmem [shape: bf16[16,128], index: 1, kind: input, shape index: {}]
  %s2 = inlined_call_operand.vmem [shape: bf16[3,128,128], index: 2, kind: input, shape index: {}]
  %s3 = inlined_call_operand.vmem [shape: f32[4,128], index: 3, kind: input, shape index: {}]
  %s4 = inlined_call_operand.hbm [shape: f32[448,128], index: 4, kind: output, shape index: {}]
  %s5 = sld [smem:[#allocation0]]
  $region26: #{tpu_custom_call.1} parent=0
    _
  %s7 = ssub.s32 1, %s5
  %s8 = scalar_select 0, %s7, %s5
  $region1: #{tpu_custom_call.1} parent=0
    #allocation2 [shape = 'u8[229376]{0}', space=vmem, size = 0x38000, scoped, tag = 'output window, operand 0, single buffered']
    #allocation3 [shape = 's32[1]{0}', space=sflag, size = 0x4, scoped, tag = 'scoped memory for tpu_custom_call.1']
    %9 = vsyncpa [#allocation3], 0
    // Predicated region
    $region2: #{tpu_custom_call.1} parent=1 // pred_check
      _
    $region3: #{tpu_custom_call.1} parent=1 // pred_check_branch
      %11 = sbr.rel (0) target = $region5
    $region4: #{tpu_custom_call.1} parent=1 // pred_region
      _
    $region5: #{tpu_custom_call.1} parent=1 // pred_fallthru
      _
    // Predicated region
    $region6: #{tpu_custom_call.1} parent=1 // pred_check
      _
    $region7: #{tpu_custom_call.1} parent=1 // pred_check_branch
      %13 = sbr.rel (0) target = $region9
    $region8: #{tpu_custom_call.1} parent=1 // pred_region
      _
    $region9: #{tpu_custom_call.1} parent=1 // pred_fallthru
      _
    // Predicated region
    $region10: #{tpu_custom_call.1} parent=1 // pred_check
      _
    $region11: #{tpu_custom_call.1} parent=1 // pred_check_branch
      %15 = sbr.rel (0) target = $region13
    $region12: #{tpu_custom_call.1} parent=1 // pred_region
      _
    $region13: #{tpu_custom_call.1} parent=1 // pred_fallthru
      _
    // Predicated region
    $region14: #{tpu_custom_call.1} parent=1 // pred_check
      _
    $region15: #{tpu_custom_call.1} parent=1 // pred_check_branch
      %17 = sbr.rel (0) target = $region17
    $region16: #{tpu_custom_call.1} parent=1 // pred_region
      _
    $region17: #{tpu_custom_call.1} parent=1 // pred_fallthru
      _
    %v19 = vld [vmem:[%s3] sm:$0x1]
    %v20 = vld [vmem:[%s3 + $0x1] sm:$0x1]
    %v21 = vld [vmem:[%s3 + $0x2] sm:$0x1]
    %v22 = vld [vmem:[%s3 + $0x3] sm:$0x1]
    %v23 = vld [vmem:[%s0] sm:$0xf]
    %v24 = vld [vmem:[%s0 + $0x4] sm:$0xf]
    %v25 = vld [vmem:[%s0 + $0x8] sm:$0xf]
    %v26 = vld [vmem:[%s0 + $0xc] sm:$0xf]
    %v27 = vld [vmem:[%s0 + $0x10] sm:$0xf]
    %v28 = vld [vmem:[%s0 + $0x14] sm:$0xf]
    %v29 = vld [vmem:[%s0 + $0x18] sm:$0xf]
    %v30 = vld [vmem:[%s0 + $0x1c] sm:$0xf]
    %v31 = vld [vmem:[%s0 + $0x20] sm:$0xf]
    %v32 = vld [vmem:[%s0 + $0x24] sm:$0xf]
    %v33 = vld [vmem:[%s0 + $0x28] sm:$0xf]
    %v34 = vld [vmem:[%s0 + $0x2c] sm:$0xf]
    %v35 = vld [vmem:[%s0 + $0x30] sm:$0xf]
    %v36 = vld [vmem:[%s0 + $0x34] sm:$0xf]
    %v37 = vld [vmem:[%s0 + $0x38] sm:$0xf]
    %v38 = vld [vmem:[%s0 + $0x3c] sm:$0xf]
    %v39 = vld [vmem:[%s0 + $0x40] sm:$0xf]
    %v40 = vld [vmem:[%s0 + $0x44] sm:$0xf]
    %v41 = vld [vmem:[%s0 + $0x48] sm:$0xf]
    %v42 = vld [vmem:[%s0 + $0x4c] sm:$0xf]
    %v43 = vld [vmem:[%s0 + $0x50] sm:$0xf]
    %v44 = vld [vmem:[%s0 + $0x54] sm:$0xf]
    %v45 = vld [vmem:[%s0 + $0x58] sm:$0xf]
    %v46 = vld [vmem:[%s0 + $0x5c] sm:$0xf]
    %v47 = vld [vmem:[%s0 + $0x60] sm:$0xf]
    %v48 = vld [vmem:[%s0 + $0x64] sm:$0xf]
    %v49 = vld [vmem:[%s0 + $0x68] sm:$0xf]
    %v50 = vld [vmem:[%s0 + $0x6c] sm:$0xf]
    %v51 = vld [vmem:[%s0 + $0x70] sm:$0xf]
    %v52 = vld [vmem:[%s0 + $0x74] sm:$0xf]
    %v53 = vld [vmem:[%s0 + $0x78] sm:$0xf]
    %v54 = vld [vmem:[%s0 + $0x7c] sm:$0xf]
    %v55 = vld [vmem:[%s0 + $0x80] sm:$0xf]
    %v56 = vld [vmem:[%s0 + $0x84] sm:$0xf]
    %v57 = vld [vmem:[%s0 + $0x88] sm:$0xf]
    %v58 = vld [vmem:[%s0 + $0x8c] sm:$0xf]
    %v59 = vld [vmem:[%s0 + $0x90] sm:$0xf]
    %v60 = vld [vmem:[%s0 + $0x94] sm:$0xf]
    %v61 = vld [vmem:[%s0 + $0x98] sm:$0xf]
    %v62 = vld [vmem:[%s0 + $0x9c] sm:$0xf]
    %v63 = vld [vmem:[%s0 + $0xa0] sm:$0xf]
    %v64 = vld [vmem:[%s0 + $0xa4] sm:$0xf]
    %v65 = vld [vmem:[%s0 + $0xa8] sm:$0xf]
    %v66 = vld [vmem:[%s0 + $0xac] sm:$0xf]
    %v67 = vld [vmem:[%s0 + $0xb0] sm:$0xf]
    %v68 = vld [vmem:[%s0 + $0xb4] sm:$0xf]
    %v69 = vld [vmem:[%s0 + $0xb8] sm:$0xf]
    %v70 = vld [vmem:[%s0 + $0xbc] sm:$0xf]
    %v71 = vld [vmem:[%s0 + $0xc0] sm:$0xf]
    %v72 = vld [vmem:[%s0 + $0xc4] sm:$0xf]
    %v73 = vld [vmem:[%s0 + $0xc8] sm:$0xf]
    %v74 = vld [vmem:[%s0 + $0xcc] sm:$0xf]
    %v75 = vld [vmem:[%s0 + $0xd0] sm:$0xf]
    %v76 = vld [vmem:[%s0 + $0xd4] sm:$0xf]
    %v77 = vld [vmem:[%s0 + $0xd8] sm:$0xf]
    %v78 = vld [vmem:[%s0 + $0xdc] sm:$0xf]
    %v79 = vld [vmem:[%s1] sm:$0xf]
    %v80 = vld [vmem:[%s1 + $0x4] sm:$0xf]
    %v81 = vperm.slane %v19, 0
    %v138 = vunpack.c.l.b16 %v23
    %v139 = vunpack.c.l.b16 %v24
    %v140 = vunpack.c.l.b16 %v25
    %v141 = vunpack.c.l.b16 %v26
    %v142 = vunpack.c.l.b16 %v27
    %v143 = vunpack.c.l.b16 %v28
    %v144 = vunpack.c.l.b16 %v29
    %v145 = vunpack.c.l.b16 %v30
    %v146 = vunpack.c.l.b16 %v31
    %v147 = vunpack.c.l.b16 %v32
    %v148 = vunpack.c.l.b16 %v33
    %v149 = vunpack.c.l.b16 %v34
    %v150 = vunpack.c.l.b16 %v35
    %v151 = vunpack.c.l.b16 %v36
    %v152 = vunpack.c.l.b16 %v37
    %v153 = vunpack.c.l.b16 %v38
    %v154 = vunpack.c.l.b16 %v39
    %v155 = vunpack.c.l.b16 %v40
    %v156 = vunpack.c.l.b16 %v41
    %v157 = vunpack.c.l.b16 %v42
    %v158 = vunpack.c.l.b16 %v43
    %v159 = vunpack.c.l.b16 %v44
    %v160 = vunpack.c.l.b16 %v45
    %v161 = vunpack.c.l.b16 %v46
    %v162 = vunpack.c.l.b16 %v47
    %v163 = vunpack.c.l.b16 %v48
    %v164 = vunpack.c.l.b16 %v49
    %v165 = vunpack.c.l.b16 %v50
    %v166 = vunpack.c.l.b16 %v51
    %v167 = vunpack.c.l.b16 %v52
    %v168 = vunpack.c.l.b16 %v53
    %v169 = vunpack.c.l.b16 %v54
    %v170 = vunpack.c.l.b16 %v55
    %v171 = vunpack.c.l.b16 %v56
    %v172 = vunpack.c.l.b16 %v57
    %v173 = vunpack.c.l.b16 %v58
    %v174 = vunpack.c.l.b16 %v59
    %v175 = vunpack.c.l.b16 %v60
    %v176 = vunpack.c.l.b16 %v61
    %v177 = vunpack.c.l.b16 %v62
    %v178 = vunpack.c.l.b16 %v63
    %v179 = vunpack.c.l.b16 %v64
    %v180 = vunpack.c.l.b16 %v65
    %v181 = vunpack.c.l.b16 %v66
    %v182 = vunpack.c.l.b16 %v67
    %v183 = vunpack.c.l.b16 %v68
    %v184 = vunpack.c.l.b16 %v69
    %v185 = vunpack.c.l.b16 %v70
    %v186 = vunpack.c.l.b16 %v71
    %v187 = vunpack.c.l.b16 %v72
    %v188 = vunpack.c.l.b16 %v73
    %v189 = vunpack.c.l.b16 %v74
    %v190 = vunpack.c.l.b16 %v75
    %v191 = vunpack.c.l.b16 %v76
    %v192 = vunpack.c.l.b16 %v77
    %v193 = vunpack.c.l.b16 %v78
    %v194 = vpack.c.b16 %v139, %v138
    %v195 = vpack.c.b16 %v141, %v140
    %v196 = vpack.c.b16 %v143, %v142
    %v197 = vpack.c.b16 %v145, %v144
    %v198 = vpack.c.b16 %v147, %v146
    %v199 = vpack.c.b16 %v149, %v148
    %v200 = vpack.c.b16 %v151, %v150
    %v201 = vpack.c.b16 %v153, %v152
    %v202 = vpack.c.b16 %v155, %v154
    %v203 = vpack.c.b16 %v157, %v156
    %v204 = vpack.c.b16 %v159, %v158
    %v205 = vpack.c.b16 %v161, %v160
    %v206 = vpack.c.b16 %v163, %v162
    %v207 = vpack.c.b16 %v165, %v164
    %v208 = vpack.c.b16 %v167, %v166
    %v209 = vpack.c.b16 %v169, %v168
    %v210 = vpack.c.b16 %v171, %v170
    %v211 = vpack.c.b16 %v173, %v172
    %v212 = vpack.c.b16 %v175, %v174
    %v213 = vpack.c.b16 %v177, %v176
    %v214 = vpack.c.b16 %v179, %v178
    %v215 = vpack.c.b16 %v181, %v180
    %v216 = vpack.c.b16 %v183, %v182
    %v217 = vpack.c.b16 %v185, %v184
    %v218 = vpack.c.b16 %v187, %v186
    %v219 = vpack.c.b16 %v189, %v188
    %v220 = vpack.c.b16 %v191, %v190
    %v221 = vpack.c.b16 %v193, %v192
    %v224 = vunpack.c.l.b16 %v79
    %v225 = vunpack.c.l.b16 %v80
    %v226 = vpack.c.b16 %v225, %v224
    %vm228 = vcmask 130048
    %v230 = vsel %vm228, %v194, 0
    %v233 = vsel %vm228, %v195, 0
    %v236 = vsel %vm228, %v196, 0
    %v239 = vsel %vm228, %v197, 0
    %v242 = vsel %vm228, %v198, 0
    %v245 = vsel %vm228, %v199, 0
    %v248 = vsel %vm228, %v200, 0
    %v251 = vsel %vm228, %v201, 0
    %v254 = vsel %vm228, %v202, 0
    %v257 = vsel %vm228, %v203, 0
    %v260 = vsel %vm228, %v204, 0
    %v263 = vsel %vm228, %v205, 0
    %v266 = vsel %vm228, %v206, 0
    %v269 = vsel %vm228, %v207, 0
    %v272 = vsel %vm228, %v208, 0
    %v275 = vsel %vm228, %v209, 0
    %v278 = vsel %vm228, %v210, 0
    %v281 = vsel %vm228, %v211, 0
    %v284 = vsel %vm228, %v212, 0
    %v287 = vsel %vm228, %v213, 0
    %v290 = vsel %vm228, %v214, 0
    %v293 = vsel %vm228, %v215, 0
    %v296 = vsel %vm228, %v216, 0
    %v299 = vsel %vm228, %v217, 0
    %v302 = vsel %vm228, %v218, 0
    %v305 = vsel %vm228, %v219, 0
    %v308 = vsel %vm228, %v220, 0
    %v311 = vsel %vm228, %v221, 0
    %313 = vmatpush.bf16.msra.mxu0 0
    %314 = vmatpush.bf16.msra.mxu0 0
    %315 = vmatpush.bf16.msra.mxu0 0
    %316 = vmatpush.bf16.msra.mxu0 0
    %317 = vmatpush.bf16.msra.mxu0 0
    %318 = vmatpush.bf16.msra.mxu0 0
    %319 = vmatpush.bf16.msra.mxu0 0
    %320 = vmatpush.bf16.msra.mxu0 %v226
    %321 = vmatmul.bf16.gmra.mxu0 %v230
    %v322 = vpop.f32.mrf.mxu0
    %v323 = vadd.f32 %v81, %v322
    %v324 = vpop.f32.mrf.mxu0
    %v325 = vadd.f32 %v81, %v324
    %326 = vmatmul.bf16.gmra.mxu0 %v233
    %v327 = vpop.f32.mrf.mxu0
    %v328 = vadd.f32 %v81, %v327
    %v329 = vpop.f32.mrf.mxu0
    %v330 = vadd.f32 %v81, %v329
    %331 = vmatmul.bf16.gmra.mxu0 %v236
    %v332 = vpop.f32.mrf.mxu0
    %v333 = vadd.f32 %v81, %v332
    %v334 = vpop.f32.mrf.mxu0
    %v335 = vadd.f32 %v81, %v334
    %336 = vmatmul.bf16.gmra.mxu0 %v239
    %v337 = vpop.f32.mrf.mxu0
    %v338 = vadd.f32 %v81, %v337
    %v339 = vpop.f32.mrf.mxu0
    %v340 = vadd.f32 %v81, %v339
    %341 = vmatmul.bf16.gmra.mxu0 %v242
    %v342 = vpop.f32.mrf.mxu0
    %v343 = vadd.f32 %v81, %v342
    %v344 = vpop.f32.mrf.mxu0
    %v345 = vadd.f32 %v81, %v344
    %346 = vmatmul.bf16.gmra.mxu0 %v245
    %v347 = vpop.f32.mrf.mxu0
    %v348 = vadd.f32 %v81, %v347
    %v349 = vpop.f32.mrf.mxu0
    %v350 = vadd.f32 %v81, %v349
    %351 = vmatmul.bf16.gmra.mxu0 %v248
    %v352 = vpop.f32.mrf.mxu0
    %v353 = vadd.f32 %v81, %v352
    %v354 = vpop.f32.mrf.mxu0
    %v355 = vadd.f32 %v81, %v354
    %356 = vmatmul.bf16.gmra.mxu0 %v251
    %v357 = vpop.f32.mrf.mxu0
    %v358 = vadd.f32 %v81, %v357
    %v359 = vpop.f32.mrf.mxu0
    %v360 = vadd.f32 %v81, %v359
    %361 = vmatmul.bf16.gmra.mxu0 %v254
    %v362 = vpop.f32.mrf.mxu0
    %v363 = vadd.f32 %v81, %v362
    %v364 = vpop.f32.mrf.mxu0
    %v365 = vadd.f32 %v81, %v364
    %366 = vmatmul.bf16.gmra.mxu0 %v257
    %v367 = vpop.f32.mrf.mxu0
    %v368 = vadd.f32 %v81, %v367
    %v369 = vpop.f32.mrf.mxu0
    %v370 = vadd.f32 %v81, %v369
    %371 = vmatmul.bf16.gmra.mxu0 %v260
    %v372 = vpop.f32.mrf.mxu0
    %v373 = vadd.f32 %v81, %v372
    %v374 = vpop.f32.mrf.mxu0
    %v375 = vadd.f32 %v81, %v374
    %376 = vmatmul.bf16.gmra.mxu0 %v263
    %v377 = vpop.f32.mrf.mxu0
    %v378 = vadd.f32 %v81, %v377
    %v379 = vpop.f32.mrf.mxu0
    %v380 = vadd.f32 %v81, %v379
    %381 = vmatmul.bf16.gmra.mxu0 %v266
    %v382 = vpop.f32.mrf.mxu0
    %v383 = vadd.f32 %v81, %v382
    %v384 = vpop.f32.mrf.mxu0
    %v385 = vadd.f32 %v81, %v384
    %386 = vmatmul.bf16.gmra.mxu0 %v269
    %v387 = vpop.f32.mrf.mxu0
    %v388 = vadd.f32 %v81, %v387
    %v389 = vpop.f32.mrf.mxu0
    %v390 = vadd.f32 %v81, %v389
    %391 = vmatmul.bf16.gmra.mxu0 %v272
    %v392 = vpop.f32.mrf.mxu0
    %v393 = vadd.f32 %v81, %v392
    %v394 = vpop.f32.mrf.mxu0
    %v395 = vadd.f32 %v81, %v394
    %396 = vmatmul.bf16.gmra.mxu0 %v275
    %v397 = vpop.f32.mrf.mxu0
    %v398 = vadd.f32 %v81, %v397
    %v399 = vpop.f32.mrf.mxu0
    %v400 = vadd.f32 %v81, %v399
    %401 = vmatmul.bf16.gmra.mxu0 %v278
    %v402 = vpop.f32.mrf.mxu0
    %v403 = vadd.f32 %v81, %v402
    %v404 = vpop.f32.mrf.mxu0
    %v405 = vadd.f32 %v81, %v404
    %406 = vmatmul.bf16.gmra.mxu0 %v281
    %v407 = vpop.f32.mrf.mxu0
    %v408 = vadd.f32 %v81, %v407
    %v409 = vpop.f32.mrf.mxu0
    %v410 = vadd.f32 %v81, %v409
    %411 = vmatmul.bf16.gmra.mxu0 %v284
    %v412 = vpop.f32.mrf.mxu0
    %v413 = vadd.f32 %v81, %v412
    %v414 = vpop.f32.mrf.mxu0
    %v415 = vadd.f32 %v81, %v414
    %416 = vmatmul.bf16.gmra.mxu0 %v287
    %v417 = vpop.f32.mrf.mxu0
    %v418 = vadd.f32 %v81, %v417
    %v419 = vpop.f32.mrf.mxu0
    %v420 = vadd.f32 %v81, %v419
    %421 = vmatmul.bf16.gmra.mxu0 %v290
    %v422 = vpop.f32.mrf.mxu0
    %v423 = vadd.f32 %v81, %v422
    %v424 = vpop.f32.mrf.mxu0
    %v425 = vadd.f32 %v81, %v424
    %426 = vmatmul.bf16.gmra.mxu0 %v293
    %v427 = vpop.f32.mrf.mxu0
    %v428 = vadd.f32 %v81, %v427
    %v429 = vpop.f32.mrf.mxu0
    %v430 = vadd.f32 %v81, %v429
    %431 = vmatmul.bf16.gmra.mxu0 %v296
    %v432 = vpop.f32.mrf.mxu0
    %v433 = vadd.f32 %v81, %v432
    %v434 = vpop.f32.mrf.mxu0
    %v435 = vadd.f32 %v81, %v434
    %436 = vmatmul.bf16.gmra.mxu0 %v299
    %v437 = vpop.f32.mrf.mxu0
    %v438 = vadd.f32 %v81, %v437
    %v439 = vpop.f32.mrf.mxu0
    %v440 = vadd.f32 %v81, %v439
    %441 = vmatmul.bf16.gmra.mxu0 %v302
    %v442 = vpop.f32.mrf.mxu0
    %v443 = vadd.f32 %v81, %v442
    %v444 = vpop.f32.mrf.mxu0
    %v445 = vadd.f32 %v81, %v444
    %446 = vmatmul.bf16.gmra.mxu0 %v305
    %v447 = vpop.f32.mrf.mxu0
    %v448 = vadd.f32 %v81, %v447
    %v449 = vpop.f32.mrf.mxu0
    %v450 = vadd.f32 %v81, %v449
    %451 = vmatmul.bf16.gmra.mxu0 %v308
    %v452 = vpop.f32.mrf.mxu0
    %v453 = vadd.f32 %v81, %v452
    %v454 = vpop.f32.mrf.mxu0
    %v455 = vadd.f32 %v81, %v454
    %456 = vmatmul.bf16.gmra.mxu0 %v311
    %v457 = vpop.f32.mrf.mxu0
    %v458 = vadd.f32 %v81, %v457
    %v459 = vpop.f32.mrf.mxu0
    %v460 = vadd.f32 %v81, %v459
    %461 = vdwg.mxu0
    %v462 = vmax.f32 %v323, 0.0
    %v463 = vmax.f32 %v325, 0.0
    %v464 = vmax.f32 %v328, 0.0
    %v465 = vmax.f32 %v330, 0.0
    %v466 = vmax.f32 %v333, 0.0
    %v467 = vmax.f32 %v335, 0.0
    %v468 = vmax.f32 %v338, 0.0
    %v469 = vmax.f32 %v340, 0.0
    %v470 = vmax.f32 %v343, 0.0
    %v471 = vmax.f32 %v345, 0.0
    %v472 = vmax.f32 %v348, 0.0
    %v473 = vmax.f32 %v350, 0.0
    %v474 = vmax.f32 %v353, 0.0
    %v475 = vmax.f32 %v355, 0.0
    %v476 = vmax.f32 %v358, 0.0
    %v477 = vmax.f32 %v360, 0.0
    %v478 = vmax.f32 %v363, 0.0
    %v479 = vmax.f32 %v365, 0.0
    %v480 = vmax.f32 %v368, 0.0
    %v481 = vmax.f32 %v370, 0.0
    %v482 = vmax.f32 %v373, 0.0
    %v483 = vmax.f32 %v375, 0.0
    %v484 = vmax.f32 %v378, 0.0
    %v485 = vmax.f32 %v380, 0.0
    %v486 = vmax.f32 %v383, 0.0
    %v487 = vmax.f32 %v385, 0.0
    %v488 = vmax.f32 %v388, 0.0
    %v489 = vmax.f32 %v390, 0.0
    %v490 = vmax.f32 %v393, 0.0
    %v491 = vmax.f32 %v395, 0.0
    %v492 = vmax.f32 %v398, 0.0
    %v493 = vmax.f32 %v400, 0.0
    %v494 = vmax.f32 %v403, 0.0
    %v495 = vmax.f32 %v405, 0.0
    %v496 = vmax.f32 %v408, 0.0
    %v497 = vmax.f32 %v410, 0.0
    %v498 = vmax.f32 %v413, 0.0
    %v499 = vmax.f32 %v415, 0.0
    %v500 = vmax.f32 %v418, 0.0
    %v501 = vmax.f32 %v420, 0.0
    %v502 = vmax.f32 %v423, 0.0
    %v503 = vmax.f32 %v425, 0.0
    %v504 = vmax.f32 %v428, 0.0
    %v505 = vmax.f32 %v430, 0.0
    %v506 = vmax.f32 %v433, 0.0
    %v507 = vmax.f32 %v435, 0.0
    %v508 = vmax.f32 %v438, 0.0
    %v509 = vmax.f32 %v440, 0.0
    %v510 = vmax.f32 %v443, 0.0
    %v511 = vmax.f32 %v445, 0.0
    %v512 = vmax.f32 %v448, 0.0
    %v513 = vmax.f32 %v450, 0.0
    %v514 = vmax.f32 %v453, 0.0
    %v515 = vmax.f32 %v455, 0.0
    %v516 = vmax.f32 %v458, 0.0
    %v517 = vmax.f32 %v460, 0.0
    %v518 = vpack.c.bf16 %v463, %v462
    %v519 = vpack.c.bf16 %v465, %v464
    %v520 = vpack.c.bf16 %v467, %v466
    %v521 = vpack.c.bf16 %v469, %v468
    %v522 = vpack.c.bf16 %v471, %v470
    %v523 = vpack.c.bf16 %v473, %v472
    %v524 = vpack.c.bf16 %v475, %v474
    %v525 = vpack.c.bf16 %v477, %v476
    %v526 = vpack.c.bf16 %v479, %v478
    %v527 = vpack.c.bf16 %v481, %v480
    %v528 = vpack.c.bf16 %v483, %v482
    %v529 = vpack.c.bf16 %v485, %v484
    %v530 = vpack.c.bf16 %v487, %v486
    %v531 = vpack.c.bf16 %v489, %v488
    %v532 = vpack.c.bf16 %v491, %v490
    %v533 = vpack.c.bf16 %v493, %v492
    %v534 = vpack.c.bf16 %v495, %v494
    %v535 = vpack.c.bf16 %v497, %v496
    %v536 = vpack.c.bf16 %v499, %v498
    %v537 = vpack.c.bf16 %v501, %v500
    %v538 = vpack.c.bf16 %v503, %v502
    %v539 = vpack.c.bf16 %v505, %v504
    %v540 = vpack.c.bf16 %v507, %v506
    %v541 = vpack.c.bf16 %v509, %v508
    %v542 = vpack.c.bf16 %v511, %v510
    %v543 = vpack.c.bf16 %v513, %v512
    %v544 = vpack.c.bf16 %v515, %v514
    %v545 = vpack.c.bf16 %v517, %v516
    %v546 = vld [vmem:[%s2] sm:$0xf]
    %v547 = vld [vmem:[%s2 + $0x4] sm:$0xf]
    %v548 = vld [vmem:[%s2 + $0x8] sm:$0xf]
    %v549 = vld [vmem:[%s2 + $0xc] sm:$0xf]
    %v550 = vld [vmem:[%s2 + $0x10] sm:$0xf]
    %v551 = vld [vmem:[%s2 + $0x14] sm:$0xf]
    %v552 = vld [vmem:[%s2 + $0x18] sm:$0xf]
    %v553 = vld [vmem:[%s2 + $0x1c] sm:$0xf]
    %v554 = vld [vmem:[%s2 + $0x20] sm:$0xf]
    %v555 = vld [vmem:[%s2 + $0x24] sm:$0xf]
    %v556 = vld [vmem:[%s2 + $0x28] sm:$0xf]
    %v557 = vld [vmem:[%s2 + $0x2c] sm:$0xf]
    %v558 = vld [vmem:[%s2 + $0x30] sm:$0xf]
    %v559 = vld [vmem:[%s2 + $0x34] sm:$0xf]
    %v560 = vld [vmem:[%s2 + $0x38] sm:$0xf]
    %v561 = vld [vmem:[%s2 + $0x3c] sm:$0xf]
    %v562 = vperm.slane %v20, 0
    %v579 = vunpack.c.l.b16 %v546
    %v580 = vunpack.c.l.b16 %v547
    %v581 = vunpack.c.l.b16 %v548
    %v582 = vunpack.c.l.b16 %v549
    %v583 = vunpack.c.l.b16 %v550
    %v584 = vunpack.c.l.b16 %v551
    %v585 = vunpack.c.l.b16 %v552
    %v586 = vunpack.c.l.b16 %v553
    %v587 = vunpack.c.l.b16 %v554
    %v588 = vunpack.c.l.b16 %v555
    %v589 = vunpack.c.l.b16 %v556
    %v590 = vunpack.c.l.b16 %v557
    %v591 = vunpack.c.l.b16 %v558
    %v592 = vunpack.c.l.b16 %v559
    %v593 = vunpack.c.l.b16 %v560
    %v594 = vunpack.c.l.b16 %v561
    %v595 = vpack.c.b16 %v580, %v579
    %v596 = vpack.c.b16 %v582, %v581
    %v597 = vpack.c.b16 %v584, %v583
    %v598 = vpack.c.b16 %v586, %v585
    %v599 = vpack.c.b16 %v588, %v587
    %v600 = vpack.c.b16 %v590, %v589
    %v601 = vpack.c.b16 %v592, %v591
    %v602 = vpack.c.b16 %v594, %v593
    %611 = vmatpush.bf16.msra.mxu0 %v602
    %612 = vmatpush.bf16.msra.mxu0 %v601
    %613 = vmatpush.bf16.msra.mxu0 %v600
    %614 = vmatpush.bf16.msra.mxu0 %v599
    %615 = vmatpush.bf16.msra.mxu0 %v598
    %616 = vmatpush.bf16.msra.mxu0 %v597
    %617 = vmatpush.bf16.msra.mxu0 %v596
    %618 = vmatpush.bf16.msra.mxu0 %v595
    %619 = vmatmul.bf16.gmra.mxu0 %v518
    %v620 = vpop.f32.mrf.mxu0
    %v621 = vadd.f32 %v562, %v620
    %v622 = vpop.f32.mrf.mxu0
    %v623 = vadd.f32 %v562, %v622
    %624 = vmatmul.bf16.gmra.mxu0 %v519
    %v625 = vpop.f32.mrf.mxu0
    %v626 = vadd.f32 %v562, %v625
    %v627 = vpop.f32.mrf.mxu0
    %v628 = vadd.f32 %v562, %v627
    %629 = vmatmul.bf16.gmra.mxu0 %v520
    %v630 = vpop.f32.mrf.mxu0
    %v631 = vadd.f32 %v562, %v630
    %v632 = vpop.f32.mrf.mxu0
    %v633 = vadd.f32 %v562, %v632
    %634 = vmatmul.bf16.gmra.mxu0 %v521
    %v635 = vpop.f32.mrf.mxu0
    %v636 = vadd.f32 %v562, %v635
    %v637 = vpop.f32.mrf.mxu0
    %v638 = vadd.f32 %v562, %v637
    %639 = vmatmul.bf16.gmra.mxu0 %v522
    %v640 = vpop.f32.mrf.mxu0
    %v641 = vadd.f32 %v562, %v640
    %v642 = vpop.f32.mrf.mxu0
    %v643 = vadd.f32 %v562, %v642
    %644 = vmatmul.bf16.gmra.mxu0 %v523
    %v645 = vpop.f32.mrf.mxu0
    %v646 = vadd.f32 %v562, %v645
    %v647 = vpop.f32.mrf.mxu0
    %v648 = vadd.f32 %v562, %v647
    %649 = vmatmul.bf16.gmra.mxu0 %v524
    %v650 = vpop.f32.mrf.mxu0
    %v651 = vadd.f32 %v562, %v650
    %v652 = vpop.f32.mrf.mxu0
    %v653 = vadd.f32 %v562, %v652
    %654 = vmatmul.bf16.gmra.mxu0 %v525
    %v655 = vpop.f32.mrf.mxu0
    %v656 = vadd.f32 %v562, %v655
    %v657 = vpop.f32.mrf.mxu0
    %v658 = vadd.f32 %v562, %v657
    %659 = vmatmul.bf16.gmra.mxu0 %v526
    %v660 = vpop.f32.mrf.mxu0
    %v661 = vadd.f32 %v562, %v660
    %v662 = vpop.f32.mrf.mxu0
    %v663 = vadd.f32 %v562, %v662
    %664 = vmatmul.bf16.gmra.mxu0 %v527
    %v665 = vpop.f32.mrf.mxu0
    %v666 = vadd.f32 %v562, %v665
    %v667 = vpop.f32.mrf.mxu0
    %v668 = vadd.f32 %v562, %v667
    %669 = vmatmul.bf16.gmra.mxu0 %v528
    %v670 = vpop.f32.mrf.mxu0
    %v671 = vadd.f32 %v562, %v670
    %v672 = vpop.f32.mrf.mxu0
    %v673 = vadd.f32 %v562, %v672
    %674 = vmatmul.bf16.gmra.mxu0 %v529
    %v675 = vpop.f32.mrf.mxu0
    %v676 = vadd.f32 %v562, %v675
    %v677 = vpop.f32.mrf.mxu0
    %v678 = vadd.f32 %v562, %v677
    %679 = vmatmul.bf16.gmra.mxu0 %v530
    %v680 = vpop.f32.mrf.mxu0
    %v681 = vadd.f32 %v562, %v680
    %v682 = vpop.f32.mrf.mxu0
    %v683 = vadd.f32 %v562, %v682
    %684 = vmatmul.bf16.gmra.mxu0 %v531
    %v685 = vpop.f32.mrf.mxu0
    %v686 = vadd.f32 %v562, %v685
    %v687 = vpop.f32.mrf.mxu0
    %v688 = vadd.f32 %v562, %v687
    %689 = vmatmul.bf16.gmra.mxu0 %v532
    %v690 = vpop.f32.mrf.mxu0
    %v691 = vadd.f32 %v562, %v690
    %v692 = vpop.f32.mrf.mxu0
    %v693 = vadd.f32 %v562, %v692
    %694 = vmatmul.bf16.gmra.mxu0 %v533
    %v695 = vpop.f32.mrf.mxu0
    %v696 = vadd.f32 %v562, %v695
    %v697 = vpop.f32.mrf.mxu0
    %v698 = vadd.f32 %v562, %v697
    %699 = vmatmul.bf16.gmra.mxu0 %v534
    %v700 = vpop.f32.mrf.mxu0
    %v701 = vadd.f32 %v562, %v700
    %v702 = vpop.f32.mrf.mxu0
    %v703 = vadd.f32 %v562, %v702
    %704 = vmatmul.bf16.gmra.mxu0 %v535
    %v705 = vpop.f32.mrf.mxu0
    %v706 = vadd.f32 %v562, %v705
    %v707 = vpop.f32.mrf.mxu0
    %v708 = vadd.f32 %v562, %v707
    %709 = vmatmul.bf16.gmra.mxu0 %v536
    %v710 = vpop.f32.mrf.mxu0
    %v711 = vadd.f32 %v562, %v710
    %v712 = vpop.f32.mrf.mxu0
    %v713 = vadd.f32 %v562, %v712
    %714 = vmatmul.bf16.gmra.mxu0 %v537
    %v715 = vpop.f32.mrf.mxu0
    %v716 = vadd.f32 %v562, %v715
    %v717 = vpop.f32.mrf.mxu0
    %v718 = vadd.f32 %v562, %v717
    %719 = vmatmul.bf16.gmra.mxu0 %v538
    %v720 = vpop.f32.mrf.mxu0
    %v721 = vadd.f32 %v562, %v720
    %v722 = vpop.f32.mrf.mxu0
    %v723 = vadd.f32 %v562, %v722
    %724 = vmatmul.bf16.gmra.mxu0 %v539
    %v725 = vpop.f32.mrf.mxu0
    %v726 = vadd.f32 %v562, %v725
    %v727 = vpop.f32.mrf.mxu0
    %v728 = vadd.f32 %v562, %v727
    %729 = vmatmul.bf16.gmra.mxu0 %v540
    %v730 = vpop.f32.mrf.mxu0
    %v731 = vadd.f32 %v562, %v730
    %v732 = vpop.f32.mrf.mxu0
    %v733 = vadd.f32 %v562, %v732
    %734 = vmatmul.bf16.gmra.mxu0 %v541
    %v735 = vpop.f32.mrf.mxu0
    %v736 = vadd.f32 %v562, %v735
    %v737 = vpop.f32.mrf.mxu0
    %v738 = vadd.f32 %v562, %v737
    %739 = vmatmul.bf16.gmra.mxu0 %v542
    %v740 = vpop.f32.mrf.mxu0
    %v741 = vadd.f32 %v562, %v740
    %v742 = vpop.f32.mrf.mxu0
    %v743 = vadd.f32 %v562, %v742
    %744 = vmatmul.bf16.gmra.mxu0 %v543
    %v745 = vpop.f32.mrf.mxu0
    %v746 = vadd.f32 %v562, %v745
    %v747 = vpop.f32.mrf.mxu0
    %v748 = vadd.f32 %v562, %v747
    %749 = vmatmul.bf16.gmra.mxu0 %v544
    %v750 = vpop.f32.mrf.mxu0
    %v751 = vadd.f32 %v562, %v750
    %v752 = vpop.f32.mrf.mxu0
    %v753 = vadd.f32 %v562, %v752
    %754 = vmatmul.bf16.gmra.mxu0 %v545
    %v755 = vpop.f32.mrf.mxu0
    %v756 = vadd.f32 %v562, %v755
    %v757 = vpop.f32.mrf.mxu0
    %v758 = vadd.f32 %v562, %v757
    %759 = vdwg.mxu0
    %v760 = vmax.f32 %v621, 0.0
    %v761 = vmax.f32 %v623, 0.0
    %v762 = vmax.f32 %v626, 0.0
    %v763 = vmax.f32 %v628, 0.0
    %v764 = vmax.f32 %v631, 0.0
    %v765 = vmax.f32 %v633, 0.0
    %v766 = vmax.f32 %v636, 0.0
    %v767 = vmax.f32 %v638, 0.0
    %v768 = vmax.f32 %v641, 0.0
    %v769 = vmax.f32 %v643, 0.0
    %v770 = vmax.f32 %v646, 0.0
    %v771 = vmax.f32 %v648, 0.0
    %v772 = vmax.f32 %v651, 0.0
    %v773 = vmax.f32 %v653, 0.0
    %v774 = vmax.f32 %v656, 0.0
    %v775 = vmax.f32 %v658, 0.0
    %v776 = vmax.f32 %v661, 0.0
    %v777 = vmax.f32 %v663, 0.0
    %v778 = vmax.f32 %v666, 0.0
    %v779 = vmax.f32 %v668, 0.0
    %v780 = vmax.f32 %v671, 0.0
    %v781 = vmax.f32 %v673, 0.0
    %v782 = vmax.f32 %v676, 0.0
    %v783 = vmax.f32 %v678, 0.0
    %v784 = vmax.f32 %v681, 0.0
    %v785 = vmax.f32 %v683, 0.0
    %v786 = vmax.f32 %v686, 0.0
    %v787 = vmax.f32 %v688, 0.0
    %v788 = vmax.f32 %v691, 0.0
    %v789 = vmax.f32 %v693, 0.0
    %v790 = vmax.f32 %v696, 0.0
    %v791 = vmax.f32 %v698, 0.0
    %v792 = vmax.f32 %v701, 0.0
    %v793 = vmax.f32 %v703, 0.0
    %v794 = vmax.f32 %v706, 0.0
    %v795 = vmax.f32 %v708, 0.0
    %v796 = vmax.f32 %v711, 0.0
    %v797 = vmax.f32 %v713, 0.0
    %v798 = vmax.f32 %v716, 0.0
    %v799 = vmax.f32 %v718, 0.0
    %v800 = vmax.f32 %v721, 0.0
    %v801 = vmax.f32 %v723, 0.0
    %v802 = vmax.f32 %v726, 0.0
    %v803 = vmax.f32 %v728, 0.0
    %v804 = vmax.f32 %v731, 0.0
    %v805 = vmax.f32 %v733, 0.0
    %v806 = vmax.f32 %v736, 0.0
    %v807 = vmax.f32 %v738, 0.0
    %v808 = vmax.f32 %v741, 0.0
    %v809 = vmax.f32 %v743, 0.0
    %v810 = vmax.f32 %v746, 0.0
    %v811 = vmax.f32 %v748, 0.0
    %v812 = vmax.f32 %v751, 0.0
    %v813 = vmax.f32 %v753, 0.0
    %v814 = vmax.f32 %v756, 0.0
    %v815 = vmax.f32 %v758, 0.0
    %v816 = vpack.c.bf16 %v761, %v760
    %v817 = vpack.c.bf16 %v763, %v762
    %v818 = vpack.c.bf16 %v765, %v764
    %v819 = vpack.c.bf16 %v767, %v766
    %v820 = vpack.c.bf16 %v769, %v768
    %v821 = vpack.c.bf16 %v771, %v770
    %v822 = vpack.c.bf16 %v773, %v772
    %v823 = vpack.c.bf16 %v775, %v774
    %v824 = vpack.c.bf16 %v777, %v776
    %v825 = vpack.c.bf16 %v779, %v778
    %v826 = vpack.c.bf16 %v781, %v780
    %v827 = vpack.c.bf16 %v783, %v782
    %v828 = vpack.c.bf16 %v785, %v784
    %v829 = vpack.c.bf16 %v787, %v786
    %v830 = vpack.c.bf16 %v789, %v788
    %v831 = vpack.c.bf16 %v791, %v790
    %v832 = vpack.c.bf16 %v793, %v792
    %v833 = vpack.c.bf16 %v795, %v794
    %v834 = vpack.c.bf16 %v797, %v796
    %v835 = vpack.c.bf16 %v799, %v798
    %v836 = vpack.c.bf16 %v801, %v800
    %v837 = vpack.c.bf16 %v803, %v802
    %v838 = vpack.c.bf16 %v805, %v804
    %v839 = vpack.c.bf16 %v807, %v806
    %v840 = vpack.c.bf16 %v809, %v808
    %v841 = vpack.c.bf16 %v811, %v810
    %v842 = vpack.c.bf16 %v813, %v812
    %v843 = vpack.c.bf16 %v815, %v814
    %s844 = scalar_lea.vmem %s2, 64
    %v845 = vld [vmem:[%s844] sm:$0xf]
    %v846 = vld [vmem:[%s844 + $0x4] sm:$0xf]
    %v847 = vld [vmem:[%s844 + $0x8] sm:$0xf]
    %v848 = vld [vmem:[%s844 + $0xc] sm:$0xf]
    %v849 = vld [vmem:[%s844 + $0x10] sm:$0xf]
    %v850 = vld [vmem:[%s844 + $0x14] sm:$0xf]
    %v851 = vld [vmem:[%s844 + $0x18] sm:$0xf]
    %v852 = vld [vmem:[%s844 + $0x1c] sm:$0xf]
    %v853 = vld [vmem:[%s844 + $0x20] sm:$0xf]
    %v854 = vld [vmem:[%s844 + $0x24] sm:$0xf]
    %v855 = vld [vmem:[%s844 + $0x28] sm:$0xf]
    %v856 = vld [vmem:[%s844 + $0x2c] sm:$0xf]
    %v857 = vld [vmem:[%s844 + $0x30] sm:$0xf]
    %v858 = vld [vmem:[%s844 + $0x34] sm:$0xf]
    %v859 = vld [vmem:[%s844 + $0x38] sm:$0xf]
    %v860 = vld [vmem:[%s844 + $0x3c] sm:$0xf]
    %v861 = vperm.slane %v21, 0
    %v878 = vunpack.c.l.b16 %v845
    %v879 = vunpack.c.l.b16 %v846
    %v880 = vunpack.c.l.b16 %v847
    %v881 = vunpack.c.l.b16 %v848
    %v882 = vunpack.c.l.b16 %v849
    %v883 = vunpack.c.l.b16 %v850
    %v884 = vunpack.c.l.b16 %v851
    %v885 = vunpack.c.l.b16 %v852
    %v886 = vunpack.c.l.b16 %v853
    %v887 = vunpack.c.l.b16 %v854
    %v888 = vunpack.c.l.b16 %v855
    %v889 = vunpack.c.l.b16 %v856
    %v890 = vunpack.c.l.b16 %v857
    %v891 = vunpack.c.l.b16 %v858
    %v892 = vunpack.c.l.b16 %v859
    %v893 = vunpack.c.l.b16 %v860
    %v894 = vpack.c.b16 %v879, %v878
    %v895 = vpack.c.b16 %v881, %v880
    %v896 = vpack.c.b16 %v883, %v882
    %v897 = vpack.c.b16 %v885, %v884
    %v898 = vpack.c.b16 %v887, %v886
    %v899 = vpack.c.b16 %v889, %v888
    %v900 = vpack.c.b16 %v891, %v890
    %v901 = vpack.c.b16 %v893, %v892
    %910 = vmatpush.bf16.msra.mxu0 %v901
    %911 = vmatpush.bf16.msra.mxu0 %v900
    %912 = vmatpush.bf16.msra.mxu0 %v899
    %913 = vmatpush.bf16.msra.mxu0 %v898
    %914 = vmatpush.bf16.msra.mxu0 %v897
    %915 = vmatpush.bf16.msra.mxu0 %v896
    %916 = vmatpush.bf16.msra.mxu0 %v895
    %917 = vmatpush.bf16.msra.mxu0 %v894
    %918 = vmatmul.bf16.gmra.mxu0 %v816
    %v919 = vpop.f32.mrf.mxu0
    %v920 = vadd.f32 %v861, %v919
    %v921 = vpop.f32.mrf.mxu0
    %v922 = vadd.f32 %v861, %v921
    %923 = vmatmul.bf16.gmra.mxu0 %v817
    %v924 = vpop.f32.mrf.mxu0
    %v925 = vadd.f32 %v861, %v924
    %v926 = vpop.f32.mrf.mxu0
    %v927 = vadd.f32 %v861, %v926
    %928 = vmatmul.bf16.gmra.mxu0 %v818
    %v929 = vpop.f32.mrf.mxu0
    %v930 = vadd.f32 %v861, %v929
    %v931 = vpop.f32.mrf.mxu0
    %v932 = vadd.f32 %v861, %v931
    %933 = vmatmul.bf16.gmra.mxu0 %v819
    %v934 = vpop.f32.mrf.mxu0
    %v935 = vadd.f32 %v861, %v934
    %v936 = vpop.f32.mrf.mxu0
    %v937 = vadd.f32 %v861, %v936
    %938 = vmatmul.bf16.gmra.mxu0 %v820
    %v939 = vpop.f32.mrf.mxu0
    %v940 = vadd.f32 %v861, %v939
    %v941 = vpop.f32.mrf.mxu0
    %v942 = vadd.f32 %v861, %v941
    %943 = vmatmul.bf16.gmra.mxu0 %v821
    %v944 = vpop.f32.mrf.mxu0
    %v945 = vadd.f32 %v861, %v944
    %v946 = vpop.f32.mrf.mxu0
    %v947 = vadd.f32 %v861, %v946
    %948 = vmatmul.bf16.gmra.mxu0 %v822
    %v949 = vpop.f32.mrf.mxu0
    %v950 = vadd.f32 %v861, %v949
    %v951 = vpop.f32.mrf.mxu0
    %v952 = vadd.f32 %v861, %v951
    %953 = vmatmul.bf16.gmra.mxu0 %v823
    %v954 = vpop.f32.mrf.mxu0
    %v955 = vadd.f32 %v861, %v954
    %v956 = vpop.f32.mrf.mxu0
    %v957 = vadd.f32 %v861, %v956
    %958 = vmatmul.bf16.gmra.mxu0 %v824
    %v959 = vpop.f32.mrf.mxu0
    %v960 = vadd.f32 %v861, %v959
    %v961 = vpop.f32.mrf.mxu0
    %v962 = vadd.f32 %v861, %v961
    %963 = vmatmul.bf16.gmra.mxu0 %v825
    %v964 = vpop.f32.mrf.mxu0
    %v965 = vadd.f32 %v861, %v964
    %v966 = vpop.f32.mrf.mxu0
    %v967 = vadd.f32 %v861, %v966
    %968 = vmatmul.bf16.gmra.mxu0 %v826
    %v969 = vpop.f32.mrf.mxu0
    %v970 = vadd.f32 %v861, %v969
    %v971 = vpop.f32.mrf.mxu0
    %v972 = vadd.f32 %v861, %v971
    %973 = vmatmul.bf16.gmra.mxu0 %v827
    %v974 = vpop.f32.mrf.mxu0
    %v975 = vadd.f32 %v861, %v974
    %v976 = vpop.f32.mrf.mxu0
    %v977 = vadd.f32 %v861, %v976
    %978 = vmatmul.bf16.gmra.mxu0 %v828
    %v979 = vpop.f32.mrf.mxu0
    %v980 = vadd.f32 %v861, %v979
    %v981 = vpop.f32.mrf.mxu0
    %v982 = vadd.f32 %v861, %v981
    %983 = vmatmul.bf16.gmra.mxu0 %v829
    %v984 = vpop.f32.mrf.mxu0
    %v985 = vadd.f32 %v861, %v984
    %v986 = vpop.f32.mrf.mxu0
    %v987 = vadd.f32 %v861, %v986
    %988 = vmatmul.bf16.gmra.mxu0 %v830
    %v989 = vpop.f32.mrf.mxu0
    %v990 = vadd.f32 %v861, %v989
    %v991 = vpop.f32.mrf.mxu0
    %v992 = vadd.f32 %v861, %v991
    %993 = vmatmul.bf16.gmra.mxu0 %v831
    %v994 = vpop.f32.mrf.mxu0
    %v995 = vadd.f32 %v861, %v994
    %v996 = vpop.f32.mrf.mxu0
    %v997 = vadd.f32 %v861, %v996
    %998 = vmatmul.bf16.gmra.mxu0 %v832
    %v999 = vpop.f32.mrf.mxu0
    %v1000 = vadd.f32 %v861, %v999
    %v1001 = vpop.f32.mrf.mxu0
    %v1002 = vadd.f32 %v861, %v1001
    %1003 = vmatmul.bf16.gmra.mxu0 %v833
    %v1004 = vpop.f32.mrf.mxu0
    %v1005 = vadd.f32 %v861, %v1004
    %v1006 = vpop.f32.mrf.mxu0
    %v1007 = vadd.f32 %v861, %v1006
    %1008 = vmatmul.bf16.gmra.mxu0 %v834
    %v1009 = vpop.f32.mrf.mxu0
    %v1010 = vadd.f32 %v861, %v1009
    %v1011 = vpop.f32.mrf.mxu0
    %v1012 = vadd.f32 %v861, %v1011
    %1013 = vmatmul.bf16.gmra.mxu0 %v835
    %v1014 = vpop.f32.mrf.mxu0
    %v1015 = vadd.f32 %v861, %v1014
    %v1016 = vpop.f32.mrf.mxu0
    %v1017 = vadd.f32 %v861, %v1016
    %1018 = vmatmul.bf16.gmra.mxu0 %v836
    %v1019 = vpop.f32.mrf.mxu0
    %v1020 = vadd.f32 %v861, %v1019
    %v1021 = vpop.f32.mrf.mxu0
    %v1022 = vadd.f32 %v861, %v1021
    %1023 = vmatmul.bf16.gmra.mxu0 %v837
    %v1024 = vpop.f32.mrf.mxu0
    %v1025 = vadd.f32 %v861, %v1024
    %v1026 = vpop.f32.mrf.mxu0
    %v1027 = vadd.f32 %v861, %v1026
    %1028 = vmatmul.bf16.gmra.mxu0 %v838
    %v1029 = vpop.f32.mrf.mxu0
    %v1030 = vadd.f32 %v861, %v1029
    %v1031 = vpop.f32.mrf.mxu0
    %v1032 = vadd.f32 %v861, %v1031
    %1033 = vmatmul.bf16.gmra.mxu0 %v839
    %v1034 = vpop.f32.mrf.mxu0
    %v1035 = vadd.f32 %v861, %v1034
    %v1036 = vpop.f32.mrf.mxu0
    %v1037 = vadd.f32 %v861, %v1036
    %1038 = vmatmul.bf16.gmra.mxu0 %v840
    %v1039 = vpop.f32.mrf.mxu0
    %v1040 = vadd.f32 %v861, %v1039
    %v1041 = vpop.f32.mrf.mxu0
    %v1042 = vadd.f32 %v861, %v1041
    %1043 = vmatmul.bf16.gmra.mxu0 %v841
    %v1044 = vpop.f32.mrf.mxu0
    %v1045 = vadd.f32 %v861, %v1044
    %v1046 = vpop.f32.mrf.mxu0
    %v1047 = vadd.f32 %v861, %v1046
    %1048 = vmatmul.bf16.gmra.mxu0 %v842
    %v1049 = vpop.f32.mrf.mxu0
    %v1050 = vadd.f32 %v861, %v1049
    %v1051 = vpop.f32.mrf.mxu0
    %v1052 = vadd.f32 %v861, %v1051
    %1053 = vmatmul.bf16.gmra.mxu0 %v843
    %v1054 = vpop.f32.mrf.mxu0
    %v1055 = vadd.f32 %v861, %v1054
    %v1056 = vpop.f32.mrf.mxu0
    %v1057 = vadd.f32 %v861, %v1056
    %1058 = vdwg.mxu0
    %v1059 = vmax.f32 %v920, 0.0
    %v1060 = vmax.f32 %v922, 0.0
    %v1061 = vmax.f32 %v925, 0.0
    %v1062 = vmax.f32 %v927, 0.0
    %v1063 = vmax.f32 %v930, 0.0
    %v1064 = vmax.f32 %v932, 0.0
    %v1065 = vmax.f32 %v935, 0.0
    %v1066 = vmax.f32 %v937, 0.0
    %v1067 = vmax.f32 %v940, 0.0
    %v1068 = vmax.f32 %v942, 0.0
    %v1069 = vmax.f32 %v945, 0.0
    %v1070 = vmax.f32 %v947, 0.0
    %v1071 = vmax.f32 %v950, 0.0
    %v1072 = vmax.f32 %v952, 0.0
    %v1073 = vmax.f32 %v955, 0.0
    %v1074 = vmax.f32 %v957, 0.0
    %v1075 = vmax.f32 %v960, 0.0
    %v1076 = vmax.f32 %v962, 0.0
    %v1077 = vmax.f32 %v965, 0.0
    %v1078 = vmax.f32 %v967, 0.0
    %v1079 = vmax.f32 %v970, 0.0
    %v1080 = vmax.f32 %v972, 0.0
    %v1081 = vmax.f32 %v975, 0.0
    %v1082 = vmax.f32 %v977, 0.0
    %v1083 = vmax.f32 %v980, 0.0
    %v1084 = vmax.f32 %v982, 0.0
    %v1085 = vmax.f32 %v985, 0.0
    %v1086 = vmax.f32 %v987, 0.0
    %v1087 = vmax.f32 %v990, 0.0
    %v1088 = vmax.f32 %v992, 0.0
    %v1089 = vmax.f32 %v995, 0.0
    %v1090 = vmax.f32 %v997, 0.0
    %v1091 = vmax.f32 %v1000, 0.0
    %v1092 = vmax.f32 %v1002, 0.0
    %v1093 = vmax.f32 %v1005, 0.0
    %v1094 = vmax.f32 %v1007, 0.0
    %v1095 = vmax.f32 %v1010, 0.0
    %v1096 = vmax.f32 %v1012, 0.0
    %v1097 = vmax.f32 %v1015, 0.0
    %v1098 = vmax.f32 %v1017, 0.0
    %v1099 = vmax.f32 %v1020, 0.0
    %v1100 = vmax.f32 %v1022, 0.0
    %v1101 = vmax.f32 %v1025, 0.0
    %v1102 = vmax.f32 %v1027, 0.0
    %v1103 = vmax.f32 %v1030, 0.0
    %v1104 = vmax.f32 %v1032, 0.0
    %v1105 = vmax.f32 %v1035, 0.0
    %v1106 = vmax.f32 %v1037, 0.0
    %v1107 = vmax.f32 %v1040, 0.0
    %v1108 = vmax.f32 %v1042, 0.0
    %v1109 = vmax.f32 %v1045, 0.0
    %v1110 = vmax.f32 %v1047, 0.0
    %v1111 = vmax.f32 %v1050, 0.0
    %v1112 = vmax.f32 %v1052, 0.0
    %v1113 = vmax.f32 %v1055, 0.0
    %v1114 = vmax.f32 %v1057, 0.0
    %v1115 = vpack.c.bf16 %v1060, %v1059
    %v1116 = vpack.c.bf16 %v1062, %v1061
    %v1117 = vpack.c.bf16 %v1064, %v1063
    %v1118 = vpack.c.bf16 %v1066, %v1065
    %v1119 = vpack.c.bf16 %v1068, %v1067
    %v1120 = vpack.c.bf16 %v1070, %v1069
    %v1121 = vpack.c.bf16 %v1072, %v1071
    %v1122 = vpack.c.bf16 %v1074, %v1073
    %v1123 = vpack.c.bf16 %v1076, %v1075
    %v1124 = vpack.c.bf16 %v1078, %v1077
    %v1125 = vpack.c.bf16 %v1080, %v1079
    %v1126 = vpack.c.bf16 %v1082, %v1081
    %v1127 = vpack.c.bf16 %v1084, %v1083
    %v1128 = vpack.c.bf16 %v1086, %v1085
    %v1129 = vpack.c.bf16 %v1088, %v1087
    %v1130 = vpack.c.bf16 %v1090, %v1089
    %v1131 = vpack.c.bf16 %v1092, %v1091
    %v1132 = vpack.c.bf16 %v1094, %v1093
    %v1133 = vpack.c.bf16 %v1096, %v1095
    %v1134 = vpack.c.bf16 %v1098, %v1097
    %v1135 = vpack.c.bf16 %v1100, %v1099
    %v1136 = vpack.c.bf16 %v1102, %v1101
    %v1137 = vpack.c.bf16 %v1104, %v1103
    %v1138 = vpack.c.bf16 %v1106, %v1105
    %v1139 = vpack.c.bf16 %v1108, %v1107
    %v1140 = vpack.c.bf16 %v1110, %v1109
    %v1141 = vpack.c.bf16 %v1112, %v1111
    %v1142 = vpack.c.bf16 %v1114, %v1113
    %s1143 = scalar_lea.vmem %s2, 128
    %v1144 = vld [vmem:[%s1143] sm:$0xf]
    %v1145 = vld [vmem:[%s1143 + $0x4] sm:$0xf]
    %v1146 = vld [vmem:[%s1143 + $0x8] sm:$0xf]
    %v1147 = vld [vmem:[%s1143 + $0xc] sm:$0xf]
    %v1148 = vld [vmem:[%s1143 + $0x10] sm:$0xf]
    %v1149 = vld [vmem:[%s1143 + $0x14] sm:$0xf]
    %v1150 = vld [vmem:[%s1143 + $0x18] sm:$0xf]
    %v1151 = vld [vmem:[%s1143 + $0x1c] sm:$0xf]
    %v1152 = vld [vmem:[%s1143 + $0x20] sm:$0xf]
    %v1153 = vld [vmem:[%s1143 + $0x24] sm:$0xf]
    %v1154 = vld [vmem:[%s1143 + $0x28] sm:$0xf]
    %v1155 = vld [vmem:[%s1143 + $0x2c] sm:$0xf]
    %v1156 = vld [vmem:[%s1143 + $0x30] sm:$0xf]
    %v1157 = vld [vmem:[%s1143 + $0x34] sm:$0xf]
    %v1158 = vld [vmem:[%s1143 + $0x38] sm:$0xf]
    %v1159 = vld [vmem:[%s1143 + $0x3c] sm:$0xf]
    %v1160 = vperm.slane %v22, 0
    %v1177 = vunpack.c.l.b16 %v1144
    %v1178 = vunpack.c.l.b16 %v1145
    %v1179 = vunpack.c.l.b16 %v1146
    %v1180 = vunpack.c.l.b16 %v1147
    %v1181 = vunpack.c.l.b16 %v1148
    %v1182 = vunpack.c.l.b16 %v1149
    %v1183 = vunpack.c.l.b16 %v1150
    %v1184 = vunpack.c.l.b16 %v1151
    %v1185 = vunpack.c.l.b16 %v1152
    %v1186 = vunpack.c.l.b16 %v1153
    %v1187 = vunpack.c.l.b16 %v1154
    %v1188 = vunpack.c.l.b16 %v1155
    %v1189 = vunpack.c.l.b16 %v1156
    %v1190 = vunpack.c.l.b16 %v1157
    %v1191 = vunpack.c.l.b16 %v1158
    %v1192 = vunpack.c.l.b16 %v1159
    %v1193 = vpack.c.b16 %v1178, %v1177
    %v1194 = vpack.c.b16 %v1180, %v1179
    %v1195 = vpack.c.b16 %v1182, %v1181
    %v1196 = vpack.c.b16 %v1184, %v1183
    %v1197 = vpack.c.b16 %v1186, %v1185
    %v1198 = vpack.c.b16 %v1188, %v1187
    %v1199 = vpack.c.b16 %v1190, %v1189
    %v1200 = vpack.c.b16 %v1192, %v1191
    %1209 = vmatpush.bf16.msra.mxu0 %v1200
    %1210 = vmatpush.bf16.msra.mxu0 %v1199
    %1211 = vmatpush.bf16.msra.mxu0 %v1198
    %1212 = vmatpush.bf16.msra.mxu0 %v1197
    %1213 = vmatpush.bf16.msra.mxu0 %v1196
    %1214 = vmatpush.bf16.msra.mxu0 %v1195
    %1215 = vmatpush.bf16.msra.mxu0 %v1194
    %1216 = vmatpush.bf16.msra.mxu0 %v1193
    %1217 = vmatmul.bf16.gmra.mxu0 %v1115
    %v1218 = vpop.f32.mrf.mxu0
    %v1219 = vadd.f32 %v1160, %v1218
    %v1220 = vpop.f32.mrf.mxu0
    %v1221 = vadd.f32 %v1160, %v1220
    %1222 = vmatmul.bf16.gmra.mxu0 %v1116
    %v1223 = vpop.f32.mrf.mxu0
    %v1224 = vadd.f32 %v1160, %v1223
    %v1225 = vpop.f32.mrf.mxu0
    %v1226 = vadd.f32 %v1160, %v1225
    %1227 = vmatmul.bf16.gmra.mxu0 %v1117
    %v1228 = vpop.f32.mrf.mxu0
    %v1229 = vadd.f32 %v1160, %v1228
    %v1230 = vpop.f32.mrf.mxu0
    %v1231 = vadd.f32 %v1160, %v1230
    %1232 = vmatmul.bf16.gmra.mxu0 %v1118
    %v1233 = vpop.f32.mrf.mxu0
    %v1234 = vadd.f32 %v1160, %v1233
    %v1235 = vpop.f32.mrf.mxu0
    %v1236 = vadd.f32 %v1160, %v1235
    %1237 = vmatmul.bf16.gmra.mxu0 %v1119
    %v1238 = vpop.f32.mrf.mxu0
    %v1239 = vadd.f32 %v1160, %v1238
    %v1240 = vpop.f32.mrf.mxu0
    %v1241 = vadd.f32 %v1160, %v1240
    %1242 = vmatmul.bf16.gmra.mxu0 %v1120
    %v1243 = vpop.f32.mrf.mxu0
    %v1244 = vadd.f32 %v1160, %v1243
    %v1245 = vpop.f32.mrf.mxu0
    %v1246 = vadd.f32 %v1160, %v1245
    %1247 = vmatmul.bf16.gmra.mxu0 %v1121
    %v1248 = vpop.f32.mrf.mxu0
    %v1249 = vadd.f32 %v1160, %v1248
    %v1250 = vpop.f32.mrf.mxu0
    %v1251 = vadd.f32 %v1160, %v1250
    %1252 = vmatmul.bf16.gmra.mxu0 %v1122
    %v1253 = vpop.f32.mrf.mxu0
    %v1254 = vadd.f32 %v1160, %v1253
    %v1255 = vpop.f32.mrf.mxu0
    %v1256 = vadd.f32 %v1160, %v1255
    %1257 = vmatmul.bf16.gmra.mxu0 %v1123
    %v1258 = vpop.f32.mrf.mxu0
    %v1259 = vadd.f32 %v1160, %v1258
    %v1260 = vpop.f32.mrf.mxu0
    %v1261 = vadd.f32 %v1160, %v1260
    %1262 = vmatmul.bf16.gmra.mxu0 %v1124
    %v1263 = vpop.f32.mrf.mxu0
    %v1264 = vadd.f32 %v1160, %v1263
    %v1265 = vpop.f32.mrf.mxu0
    %v1266 = vadd.f32 %v1160, %v1265
    %1267 = vmatmul.bf16.gmra.mxu0 %v1125
    %v1268 = vpop.f32.mrf.mxu0
    %v1269 = vadd.f32 %v1160, %v1268
    %v1270 = vpop.f32.mrf.mxu0
    %v1271 = vadd.f32 %v1160, %v1270
    %1272 = vmatmul.bf16.gmra.mxu0 %v1126
    %v1273 = vpop.f32.mrf.mxu0
    %v1274 = vadd.f32 %v1160, %v1273
    %v1275 = vpop.f32.mrf.mxu0
    %v1276 = vadd.f32 %v1160, %v1275
    %1277 = vmatmul.bf16.gmra.mxu0 %v1127
    %v1278 = vpop.f32.mrf.mxu0
    %v1279 = vadd.f32 %v1160, %v1278
    %v1280 = vpop.f32.mrf.mxu0
    %v1281 = vadd.f32 %v1160, %v1280
    %1282 = vmatmul.bf16.gmra.mxu0 %v1128
    %v1283 = vpop.f32.mrf.mxu0
    %v1284 = vadd.f32 %v1160, %v1283
    %v1285 = vpop.f32.mrf.mxu0
    %v1286 = vadd.f32 %v1160, %v1285
    %1287 = vmatmul.bf16.gmra.mxu0 %v1129
    %v1288 = vpop.f32.mrf.mxu0
    %v1289 = vadd.f32 %v1160, %v1288
    %v1290 = vpop.f32.mrf.mxu0
    %v1291 = vadd.f32 %v1160, %v1290
    %1292 = vmatmul.bf16.gmra.mxu0 %v1130
    %v1293 = vpop.f32.mrf.mxu0
    %v1294 = vadd.f32 %v1160, %v1293
    %v1295 = vpop.f32.mrf.mxu0
    %v1296 = vadd.f32 %v1160, %v1295
    %1297 = vmatmul.bf16.gmra.mxu0 %v1131
    %v1298 = vpop.f32.mrf.mxu0
    %v1299 = vadd.f32 %v1160, %v1298
    %v1300 = vpop.f32.mrf.mxu0
    %v1301 = vadd.f32 %v1160, %v1300
    %1302 = vmatmul.bf16.gmra.mxu0 %v1132
    %v1303 = vpop.f32.mrf.mxu0
    %v1304 = vadd.f32 %v1160, %v1303
    %v1305 = vpop.f32.mrf.mxu0
    %v1306 = vadd.f32 %v1160, %v1305
    %1307 = vmatmul.bf16.gmra.mxu0 %v1133
    %v1308 = vpop.f32.mrf.mxu0
    %v1309 = vadd.f32 %v1160, %v1308
    %v1310 = vpop.f32.mrf.mxu0
    %v1311 = vadd.f32 %v1160, %v1310
    %1312 = vmatmul.bf16.gmra.mxu0 %v1134
    %v1313 = vpop.f32.mrf.mxu0
    %v1314 = vadd.f32 %v1160, %v1313
    %v1315 = vpop.f32.mrf.mxu0
    %v1316 = vadd.f32 %v1160, %v1315
    %1317 = vmatmul.bf16.gmra.mxu0 %v1135
    %v1318 = vpop.f32.mrf.mxu0
    %v1319 = vadd.f32 %v1160, %v1318
    %v1320 = vpop.f32.mrf.mxu0
    %v1321 = vadd.f32 %v1160, %v1320
    %1322 = vmatmul.bf16.gmra.mxu0 %v1136
    %v1323 = vpop.f32.mrf.mxu0
    %v1324 = vadd.f32 %v1160, %v1323
    %v1325 = vpop.f32.mrf.mxu0
    %v1326 = vadd.f32 %v1160, %v1325
    %1327 = vmatmul.bf16.gmra.mxu0 %v1137
    %v1328 = vpop.f32.mrf.mxu0
    %v1329 = vadd.f32 %v1160, %v1328
    %v1330 = vpop.f32.mrf.mxu0
    %v1331 = vadd.f32 %v1160, %v1330
    %1332 = vmatmul.bf16.gmra.mxu0 %v1138
    %v1333 = vpop.f32.mrf.mxu0
    %v1334 = vadd.f32 %v1160, %v1333
    %v1335 = vpop.f32.mrf.mxu0
    %v1336 = vadd.f32 %v1160, %v1335
    %1337 = vmatmul.bf16.gmra.mxu0 %v1139
    %v1338 = vpop.f32.mrf.mxu0
    %v1339 = vadd.f32 %v1160, %v1338
    %v1340 = vpop.f32.mrf.mxu0
    %v1341 = vadd.f32 %v1160, %v1340
    %1342 = vmatmul.bf16.gmra.mxu0 %v1140
    %v1343 = vpop.f32.mrf.mxu0
    %v1344 = vadd.f32 %v1160, %v1343
    %v1345 = vpop.f32.mrf.mxu0
    %v1346 = vadd.f32 %v1160, %v1345
    %1347 = vmatmul.bf16.gmra.mxu0 %v1141
    %v1348 = vpop.f32.mrf.mxu0
    %v1349 = vadd.f32 %v1160, %v1348
    %v1350 = vpop.f32.mrf.mxu0
    %v1351 = vadd.f32 %v1160, %v1350
    %1352 = vmatmul.bf16.gmra.mxu0 %v1142
    %v1353 = vpop.f32.mrf.mxu0
    %v1354 = vadd.f32 %v1160, %v1353
    %v1355 = vpop.f32.mrf.mxu0
    %v1356 = vadd.f32 %v1160, %v1355
    %1357 = vdwg.mxu0
    %1358 = vst [vmem:[#allocation2] sm:$0xff] %v1219
    %1359 = vst [vmem:[#allocation2 + $0x8] sm:$0xff] %v1221
    %1360 = vst [vmem:[#allocation2 + $0x10] sm:$0xff] %v1224
    %1361 = vst [vmem:[#allocation2 + $0x18] sm:$0xff] %v1226
    %1362 = vst [vmem:[#allocation2 + $0x20] sm:$0xff] %v1229
    %1363 = vst [vmem:[#allocation2 + $0x28] sm:$0xff] %v1231
    %1364 = vst [vmem:[#allocation2 + $0x30] sm:$0xff] %v1234
    %1365 = vst [vmem:[#allocation2 + $0x38] sm:$0xff] %v1236
    %1366 = vst [vmem:[#allocation2 + $0x40] sm:$0xff] %v1239
    %1367 = vst [vmem:[#allocation2 + $0x48] sm:$0xff] %v1241
    %1368 = vst [vmem:[#allocation2 + $0x50] sm:$0xff] %v1244
    %1369 = vst [vmem:[#allocation2 + $0x58] sm:$0xff] %v1246
    %1370 = vst [vmem:[#allocation2 + $0x60] sm:$0xff] %v1249
    %1371 = vst [vmem:[#allocation2 + $0x68] sm:$0xff] %v1251
    %1372 = vst [vmem:[#allocation2 + $0x70] sm:$0xff] %v1254
    %1373 = vst [vmem:[#allocation2 + $0x78] sm:$0xff] %v1256
    %1374 = vst [vmem:[#allocation2 + $0x80] sm:$0xff] %v1259
    %1375 = vst [vmem:[#allocation2 + $0x88] sm:$0xff] %v1261
    %1376 = vst [vmem:[#allocation2 + $0x90] sm:$0xff] %v1264
    %1377 = vst [vmem:[#allocation2 + $0x98] sm:$0xff] %v1266
    %1378 = vst [vmem:[#allocation2 + $0xa0] sm:$0xff] %v1269
    %1379 = vst [vmem:[#allocation2 + $0xa8] sm:$0xff] %v1271
    %1380 = vst [vmem:[#allocation2 + $0xb0] sm:$0xff] %v1274
    %1381 = vst [vmem:[#allocation2 + $0xb8] sm:$0xff] %v1276
    %1382 = vst [vmem:[#allocation2 + $0xc0] sm:$0xff] %v1279
    %1383 = vst [vmem:[#allocation2 + $0xc8] sm:$0xff] %v1281
    %1384 = vst [vmem:[#allocation2 + $0xd0] sm:$0xff] %v1284
    %1385 = vst [vmem:[#allocation2 + $0xd8] sm:$0xff] %v1286
    %1386 = vst [vmem:[#allocation2 + $0xe0] sm:$0xff] %v1289
    %1387 = vst [vmem:[#allocation2 + $0xe8] sm:$0xff] %v1291
    %1388 = vst [vmem:[#allocation2 + $0xf0] sm:$0xff] %v1294
    %1389 = vst [vmem:[#allocation2 + $0xf8] sm:$0xff] %v1296
    %1390 = vst [vmem:[#allocation2 + $0x100] sm:$0xff] %v1299
    %1391 = vst [vmem:[#allocation2 + $0x108] sm:$0xff] %v1301
    %1392 = vst [vmem:[#allocation2 + $0x110] sm:$0xff] %v1304
    %1393 = vst [vmem:[#allocation2 + $0x118] sm:$0xff] %v1306
    %1394 = vst [vmem:[#allocation2 + $0x120] sm:$0xff] %v1309
    %1395 = vst [vmem:[#allocation2 + $0x128] sm:$0xff] %v1311
    %1396 = vst [vmem:[#allocation2 + $0x130] sm:$0xff] %v1314
    %1397 = vst [vmem:[#allocation2 + $0x138] sm:$0xff] %v1316
    %1398 = vst [vmem:[#allocation2 + $0x140] sm:$0xff] %v1319
    %1399 = vst [vmem:[#allocation2 + $0x148] sm:$0xff] %v1321
    %1400 = vst [vmem:[#allocation2 + $0x150] sm:$0xff] %v1324
    %1401 = vst [vmem:[#allocation2 + $0x158] sm:$0xff] %v1326
    %1402 = vst [vmem:[#allocation2 + $0x160] sm:$0xff] %v1329
    %1403 = vst [vmem:[#allocation2 + $0x168] sm:$0xff] %v1331
    %1404 = vst [vmem:[#allocation2 + $0x170] sm:$0xff] %v1334
    %1405 = vst [vmem:[#allocation2 + $0x178] sm:$0xff] %v1336
    %1406 = vst [vmem:[#allocation2 + $0x180] sm:$0xff] %v1339
    %1407 = vst [vmem:[#allocation2 + $0x188] sm:$0xff] %v1341
    %1408 = vst [vmem:[#allocation2 + $0x190] sm:$0xff] %v1344
    %1409 = vst [vmem:[#allocation2 + $0x198] sm:$0xff] %v1346
    %1410 = vst [vmem:[#allocation2 + $0x1a0] sm:$0xff] %v1349
    %1411 = vst [vmem:[#allocation2 + $0x1a8] sm:$0xff] %v1351
    %1412 = vst [vmem:[#allocation2 + $0x1b0] sm:$0xff] %v1354
    %1413 = vst [vmem:[#allocation2 + $0x1b8] sm:$0xff] %v1356
    // Predicated region
    $region18: #{tpu_custom_call.1} parent=1 // pred_check
      _
    $region19: #{tpu_custom_call.1} parent=1 // pred_check_branch
      %1415 = sbr.rel (0) target = $region21
    $region20: #{tpu_custom_call.1} parent=1 // pred_region
      %1417 = vsyncadd [#allocation3], 0
      %s1418 = sshll.u32 [#allocation2], 4
      %s1419 = int_to_ptr.vmem [resolvable:$true] %s1418
      %s1420 = sshll.u32 %s4, 4
      %s1421 = int_to_ptr.hbm [resolvable:$true] %s1420
      %1426 = dma.vmem_to_hbm [thread:$0]  %s1419, 7168, %s1421, [#allocation3], 128, 128, 8
    $region21: #{tpu_custom_call.1} parent=1 // pred_fallthru
      _
    // Predicated region
    $region22: #{tpu_custom_call.1} parent=1 // pred_check
      _
    $region23: #{tpu_custom_call.1} parent=1 // pred_check_branch
      %1428 = sbr.rel (0) target = $region25
    $region24: #{tpu_custom_call.1} parent=1 // pred_region
      %1430 = dma.done [#allocation3], 7168
    $region25: #{tpu_custom_call.1} parent=1 // pred_fallthru
      _
    %1431 = vsyncpa [#allocation3], 1

</llo_original>
